<compile_context>
chip_gen: v7x
topology: tpu7x:2x2x1
jax: 0.10.0
libtpu: 0.0.40
codegen_flags: <defaults>
</compile_context>

<pallas_src>
import functools

import jax
import jax.numpy as jnp
from jax.experimental import pallas as pl
from jax.experimental.pallas import tpu as pltpu

LABEL_SMOOTHING = 0.1
_VMEM_TILE_BUDGET = 16 * 1024 * 1024     # estimated in-flight bytes per grid step
_VMEM_LIMIT_BYTES = 40 * 1024 * 1024     # scoped-VMEM limit handed to Mosaic
_PALLAS_MIN_ELEMENTS = 4096              # below this, plain JAX beats kernel launch
_MAX_TN = 4096


def _round_up(x, m):
    return ((x + m - 1) // m) * m


# --------------------------------------------------------------------------- kernel
def _ds_loss_kernel(tgt_ref, *refs, weights, num_rows, eps):
    """One batch tile: label-smoothed CE over K heads, reduced to a tile partial sum.

    tgt_ref:       (TN, 1)   int32 class indices
    refs[:-1][k]:  (TN, C)   logits of head k (native dtype, cast to f32 here)
    refs[-1]:      (8, 128)  f32 lane-dense block holding the tile's weighted loss sum
    """
    logit_refs = refs[:-1]
    out_ref = refs[-1]
    tn, c = logit_refs[0].shape
    n = pl.program_id(0)

    y = tgt_ref[...]                                            # (TN, 1) int32
    col = jax.lax.broadcasted_iota(jnp.int32, (tn, c), 1)       # (TN, C)

    # Smoothed target distribution, built ONCE and reused for every head:
    #   q = (1-eps)*onehot + eps/C   (no padded-class branch: C is the true class count)
    on_val = jnp.float32(1.0 - eps + eps / c)
    off_val = jnp.float32(eps / c)
    q = jnp.where(col == y, on_val, off_val)                    # (TN, C)

    # Rows past the true batch size (partial boundary block) are masked out.
    row = jax.lax.broadcasted_iota(jnp.int32, (tn, 1), 0)
    row_valid = (n * tn + row) < num_rows                       # (TN, 1) bool

    total = jnp.zeros((tn, 1), jnp.float32)
    for k, w in enumerate(weights):                             # K static -> unrolled
        x = logit_refs[k][...].astype(jnp.float32)              # (TN, C)
        m = jnp.max(x, axis=-1, keepdims=True)
        lse = m + jnp.log(jnp.sum(jnp.exp(x - m), axis=-1, keepdims=True))
        soft = jnp.sum(x * q, axis=-1, keepdims=True)           # (1-eps)x_y + eps*mean(x)
        total = total + jnp.float32(w) * (lse - soft)

    masked = jnp.where(row_valid, total, jnp.float32(0.0))      # garbage rows -> 0
    tile_sum = jnp.sum(masked, axis=0, keepdims=True)           # (1, 1)
    out_ref[...] = jnp.broadcast_to(tile_sum, out_ref.shape)    # one unmasked vreg store


# ------------------------------------------------------------------------ tile logic
def _sublane_pack(itemsizes):
    """8 rows for f32, 16 for bf16, 32 for int8/fp8 (driven by narrowest head)."""
    return max(8, 32 // min(itemsizes))


def _per_row_vmem_bytes(c, itemsizes):
    # double-buffered native-dtype logits + f32 temporaries (q, x, exp) + int32 target
    return sum(2 * c * it for it in itemsizes) + 3 * c * 4 + 8


def _choose_batch_tile(n, c, itemsizes):
    pack = _sublane_pack(itemsizes)
    per_row = _per_row_vmem_bytes(c, itemsizes)
    cap = _VMEM_TILE_BUDGET // max(per_row, 1)
    # keep >= 2 grid steps when the batch allows it (v7x dual-TensorCore sharding)
    half = _round_up(max(-(-n // 2), pack), pack)
    cap = max(pack, min(cap, half, _MAX_TN))
    cap = (cap // pack) * pack
    # prefer an exact divisor of n (no partial boundary block) if one is >= cap/2
    t = cap
    while t >= max(pack, cap // 2):
        if n % t == 0:
            return t
        t -= pack
    return cap          # partial last block; masked by row_valid in the kernel


# ---------------------------------------------------------------------------- Pallas
def _pallas_weighted_ce(heads, target_idx, weights):
    """heads: list of K (N, C) arrays (native dtype); target_idx: (N,) int32."""
    K = len(heads)
    N, C = heads[0].shape
    itemsizes = [jnp.dtype(h.dtype).itemsize for h in heads]

    TN = _choose_batch_tile(N, C, itemsizes)
    num_tiles = -(-N // TN)

    tgt = target_idx.astype(jnp.int32)[:, None]                 # (N, 1)

    kernel = functools.partial(
        _ds_loss_kernel,
        weights=tuple(float(w) for w in weights),
        num_rows=N, eps=LABEL_SMOOTHING)

    head_bytes = sum(h.size * it for h, it in zip(heads, itemsizes))
    cost = pl.CostEstimate(
        flops=int(7 * N * C * K),
        transcendentals=int(N * C * K),
        bytes_accessed=int(head_bytes + tgt.size * 4 + num_tiles * 8 * 128 * 4))

    partials = pl.pallas_call(
        kernel,
        out_shape=jax.ShapeDtypeStruct((num_tiles * 8, 128), jnp.float32),
        grid_spec=pltpu.PrefetchScalarGridSpec(
            num_scalar_prefetch=0,
            grid=(num_tiles,),
            in_specs=[pl.BlockSpec((TN, 1), lambda n: (n, 0))]
                     + [pl.BlockSpec((TN, C), lambda n: (n, 0))  # full-C block: no pad
                        for _ in range(K)],
            out_specs=pl.BlockSpec((8, 128), lambda n: (n, 0)),
        ),
        compiler_params=pltpu.CompilerParams(
            dimension_semantics=("parallel",),
            vmem_limit_bytes=_VMEM_LIMIT_BYTES),
        cost_estimate=cost,
    )(tgt, *heads)

    # one lane-dense partial sum per tile lives at rows 0, 8, 16, ...
    return jnp.sum(partials[::8, 0]) / jnp.float32(N)


# ----------------------------------------------------------------------- pure-JAX ref
def _ce_label_smoothed(logits, target_idx, eps=LABEL_SMOOTHING):
    """Pure-JAX CE with label smoothing (hard integer labels), mean reduction."""
    x = jnp.asarray(logits).astype(jnp.float32)
    lse = jax.scipy.special.logsumexp(x, axis=-1)
    x_y = jnp.take_along_axis(x, target_idx[:, None].astype(jnp.int32), axis=1)[:, 0]
    x_mean = jnp.mean(x, axis=-1)
    per = lse - ((1.0 - eps) * x_y + eps * x_mean)
    return jnp.mean(per)


# ----------------------------------------------------------------------- public entry
def deep_supervision_loss(outputs, target, main_weight=0.6, use_pallas=None):
    """JAX/Pallas equivalent of DeepSupervisionLoss.forward."""
    is_list = isinstance(outputs, (list, tuple))
    heads = [jnp.asarray(o) for o in (outputs if is_list else [outputs])]
    K = len(heads)
    N, C = heads[0].shape

    target = jnp.asarray(target)
    if target.ndim == 2:
        target = jnp.argmax(target, axis=1)   # exactly what the PyTorch module does
    target = target.astype(jnp.int32)

    if (not is_list) or K == 1:
        weights = (1.0,)
    else:
        aux_w = (1.0 - main_weight) / (K - 1)
        weights = (float(main_weight),) + (float(aux_w),) * (K - 1)

    itemsizes = [jnp.dtype(h.dtype).itemsize for h in heads]
    pack = _sublane_pack(itemsizes)
    fits_vmem = _per_row_vmem_bytes(C, itemsizes) * pack <= _VMEM_TILE_BUDGET

    if use_pallas is None:
        use_pallas = (N * C) >= _PALLAS_MIN_ELEMENTS
    if N < pack or not fits_vmem:
        # TODO(synk): add class-dim tiling for extremely large K*C instead of falling back.
        use_pallas = False

    if not use_pallas:
        total = jnp.float32(0.0)
        for w, h in zip(weights, heads):
            total = total + jnp.float32(w) * _ce_label_smoothed(h, target)
        return total

    return _pallas_weighted_ce(heads, target, weights)


def _reference_loss(outputs, target, main_weight=0.6):
    """Pure-JAX reference mirroring nn.CrossEntropyLoss(label_smoothing=0.1)."""
    if not isinstance(outputs, (list, tuple)):
        outputs = [outputs]
    y = jnp.asarray(target)
    if y.ndim == 2:
        y = jnp.argmax(y, axis=1)
    y = y.astype(jnp.int32)
    K = len(outputs)
    if K == 1:
        return _ce_label_smoothed(outputs[0], y)
    aux_w = (1.0 - main_weight) / (K - 1)
    total = main_weight * _ce_label_smoothed(outputs[0], y)
    for o in outputs[1:]:
        total = total + aux_w * _ce_label_smoothed(o, y)
    return total


if __name__ == "__main__":
    key = jax.random.PRNGKey(0)
    k1, k2, k3, k4, k5, k6 = jax.random.split(key, 6)

    # --- primary: 3 heads, f32, soft 2-D target (argmax path), Pallas path ---------
    N, C = 64, 200
    outputs = [
        jax.random.normal(k1, (N, C), dtype=jnp.float32),
        jax.random.normal(k2, (N, C), dtype=jnp.float32),
        jax.random.normal(k3, (N, C), dtype=jnp.float32),
    ]
    target_2d = jax.random.normal(k4, (N, C), dtype=jnp.float32)

    loss = jax.block_until_ready(deep_supervision_loss(outputs, target_2d, 0.6))
    ref = jax.block_until_ready(_reference_loss(outputs, target_2d, 0.6))
    assert jnp.allclose(loss, ref, rtol=1e-5, atol=1e-5), (loss, ref)

    # --- single (non-list) output path ----------------------------------------------
    single = jax.block_until_ready(deep_supervision_loss(outputs[0], target_2d))
    single_ref = _reference_loss(outputs[0], target_2d)
    assert jnp.allclose(single, single_ref, rtol=1e-5, atol=1e-5), (single, single_ref)

    # --- bf16 heads (native dtype, 16-row packing), hard int targets ----------------
    Nb, Cb = 48, 300
    kb = jax.random.split(k5, 4)
    bf_heads = [jax.random.normal(kb[i], (Nb, Cb), dtype=jnp.float32).astype(jnp.bfloat16)
                for i in range(3)]
    bf_tgt = jax.random.randint(kb[3], (Nb,), 0, Cb)
    bf_loss = jax.block_until_ready(
        deep_supervision_loss(bf_heads, bf_tgt, 0.6, use_pallas=True))
    bf_ref = jax.block_until_ready(_reference_loss(bf_heads, bf_tgt, 0.6))
    assert jnp.allclose(bf_loss, bf_ref, rtol=2e-4, atol=2e-4), (bf_loss, bf_ref)

    # --- partial boundary block path: N not a multiple of the tile ------------------
    kp = jax.random.split(k6, 3)
    Np, Cp = 50, 96
    part_heads = [jax.random.normal(kp[0], (Np, Cp), dtype=jnp.float32),
                  jax.random.normal(kp[1], (Np, Cp), dtype=jnp.float32)]
    part_tgt = jax.random.randint(kp[2], (Np,), 0, Cp)
    part_p = jax.block_until_ready(
        deep_supervision_loss(part_heads, part_tgt, 0.6, use_pallas=True))
    part_r = _reference_loss(part_heads, part_tgt, 0.6)
    assert jnp.allclose(part_p, part_r, rtol=1e-5, atol=1e-5), (part_p, part_r)

    # --- tiny problem: forced-Pallas (small-C path) and auto (pure-JAX) agree --------
    tn_, tc_ = 8, 16
    tiny = [jax.random.normal(k1, (tn_, tc_), dtype=jnp.float32),
            jax.random.normal(k2, (tn_, tc_), dtype=jnp.float32)]
    tiny_tgt = jax.random.randint(k3, (tn_,), 0, tc_)
    tiny_p = jax.block_until_ready(
        deep_supervision_loss(tiny, tiny_tgt, 0.6, use_pallas=True))
    tiny_j = jax.block_until_ready(
        deep_supervision_loss(tiny, tiny_tgt, 0.6, use_pallas=False))
    tiny_r = _reference_loss(tiny, tiny_tgt, 0.6)
    assert jnp.allclose(tiny_p, tiny_r, rtol=1e-5, atol=1e-5), (tiny_p, tiny_r)
    assert jnp.allclose(tiny_j, tiny_r, rtol=1e-5, atol=1e-5), (tiny_j, tiny_r)

    print("KERNEL_OK")
</pallas_src>

<mosaic_0001>
module attributes {stable_mosaic.version = 11 : i64} {
  func.func @_ds_loss_kernel(%arg0: i32, %arg1: memref<32x1xi32, #tpu.memory_space<vmem>>, %arg2: memref<32x200xf32, #tpu.memory_space<vmem>>, %arg3: memref<32x200xf32, #tpu.memory_space<vmem>>, %arg4: memref<32x200xf32, #tpu.memory_space<vmem>>, %arg5: memref<8x128xf32, #tpu.memory_space<vmem>>) attributes {dimension_semantics = [#tpu.dimension_semantics<parallel>], iteration_bounds = array<i64: 2>, scalar_prefetch = 0 : i64, scratch_operands = 0 : i64, tpu.core_type = #tpu.core_type<tc>, window_params = [{transform_indices = @transform_0, window_bounds = array<i64: 32, 1>}, {transform_indices = @transform_1, window_bounds = array<i64: 32, 200>}, {transform_indices = @transform_2, window_bounds = array<i64: 32, 200>}, {transform_indices = @transform_3, window_bounds = array<i64: 32, 200>}, {transform_indices = @transform_4, window_bounds = array<i64: 8, 128>}]} {
    %c0 = arith.constant 0 : index
    %c0_0 = arith.constant 0 : index
    %0 = vector.load %arg1[%c0, %c0_0] : memref<32x1xi32, #tpu.memory_space<vmem>>, vector<32x1xi32>
    %1 = tpu.iota {dimensions = array<i32: 1>} : vector<32x200xi32>
    %2 = vector.broadcast %0 : vector<32x1xi32> to vector<32x200xi32>
    %3 = arith.cmpi eq, %1, %2 : vector<32x200xi32>
    %cst = arith.constant 0.900499999 : f32
    %cst_1 = arith.constant 5.000000e-04 : f32
    %4 = vector.broadcast %cst : f32 to vector<32x200xf32>
    %5 = vector.broadcast %cst_1 : f32 to vector<32x200xf32>
    %6 = arith.select %3, %4, %5 : vector<32x200xi1>, vector<32x200xf32>
    %7 = tpu.iota {dimensions = array<i32: 0>} : vector<32x1xi32>
    %c32_i32 = arith.constant 32 : i32
    %8 = arith.muli %arg0, %c32_i32 : i32
    %9 = vector.broadcast %8 : i32 to vector<32x1xi32>
    %10 = arith.addi %9, %7 : vector<32x1xi32>
    %c64_i32 = arith.constant 64 : i32
    %11 = vector.broadcast %c64_i32 : i32 to vector<32x1xi32>
    %12 = arith.cmpi slt, %10, %11 : vector<32x1xi32>
    %cst_2 = arith.constant 0.000000e+00 : f32
    %13 = vector.broadcast %cst_2 : f32 to vector<32x1xf32>
    %c0_3 = arith.constant 0 : index
    %c0_4 = arith.constant 0 : index
    %14 = vector.load %arg2[%c0_3, %c0_4] : memref<32x200xf32, #tpu.memory_space<vmem>>, vector<32x200xf32>
    %cst_5 = arith.constant dense<0xFF800000> : vector<32xf32>
    %15 = vector.multi_reduction <maximumf>, %14, %cst_5 [1] : vector<32x200xf32> to vector<32xf32>
    %16 = vector.shape_cast %15 : vector<32xf32> to vector<32x1xf32>
    %17 = vector.broadcast %16 : vector<32x1xf32> to vector<32x200xf32>
    %18 = arith.subf %14, %17 : vector<32x200xf32>
    %19 = math.exp %18 : vector<32x200xf32>
    %cst_6 = arith.constant dense<0.000000e+00> : vector<32xf32>
    %20 = vector.multi_reduction <add>, %19, %cst_6 [1] : vector<32x200xf32> to vector<32xf32>
    %21 = vector.shape_cast %20 : vector<32xf32> to vector<32x1xf32>
    %22 = math.log %21 : vector<32x1xf32>
    %23 = arith.addf %16, %22 : vector<32x1xf32>
    %24 = arith.mulf %14, %6 : vector<32x200xf32>
    %cst_7 = arith.constant dense<0.000000e+00> : vector<32xf32>
    %25 = vector.multi_reduction <add>, %24, %cst_7 [1] : vector<32x200xf32> to vector<32xf32>
    %26 = vector.shape_cast %25 : vector<32xf32> to vector<32x1xf32>
    %27 = arith.subf %23, %26 : vector<32x1xf32>
    %cst_8 = arith.constant 6.000000e-01 : f32
    %28 = vector.broadcast %cst_8 : f32 to vector<32x1xf32>
    %29 = arith.mulf %28, %27 : vector<32x1xf32>
    %30 = arith.addf %13, %29 : vector<32x1xf32>
    %c0_9 = arith.constant 0 : index
    %c0_10 = arith.constant 0 : index
    %31 = vector.load %arg3[%c0_9, %c0_10] : memref<32x200xf32, #tpu.memory_space<vmem>>, vector<32x200xf32>
    %cst_11 = arith.constant dense<0xFF800000> : vector<32xf32>
    %32 = vector.multi_reduction <maximumf>, %31, %cst_11 [1] : vector<32x200xf32> to vector<32xf32>
    %33 = vector.shape_cast %32 : vector<32xf32> to vector<32x1xf32>
    %34 = vector.broadcast %33 : vector<32x1xf32> to vector<32x200xf32>
    %35 = arith.subf %31, %34 : vector<32x200xf32>
    %36 = math.exp %35 : vector<32x200xf32>
    %cst_12 = arith.constant dense<0.000000e+00> : vector<32xf32>
    %37 = vector.multi_reduction <add>, %36, %cst_12 [1] : vector<32x200xf32> to vector<32xf32>
    %38 = vector.shape_cast %37 : vector<32xf32> to vector<32x1xf32>
    %39 = math.log %38 : vector<32x1xf32>
    %40 = arith.addf %33, %39 : vector<32x1xf32>
    %41 = arith.mulf %31, %6 : vector<32x200xf32>
    %cst_13 = arith.constant dense<0.000000e+00> : vector<32xf32>
    %42 = vector.multi_reduction <add>, %41, %cst_13 [1] : vector<32x200xf32> to vector<32xf32>
    %43 = vector.shape_cast %42 : vector<32xf32> to vector<32x1xf32>
    %44 = arith.subf %40, %43 : vector<32x1xf32>
    %cst_14 = arith.constant 2.000000e-01 : f32
    %45 = vector.broadcast %cst_14 : f32 to vector<32x1xf32>
    %46 = arith.mulf %45, %44 : vector<32x1xf32>
    %47 = arith.addf %30, %46 : vector<32x1xf32>
    %c0_15 = arith.constant 0 : index
    %c0_16 = arith.constant 0 : index
    %48 = vector.load %arg4[%c0_15, %c0_16] : memref<32x200xf32, #tpu.memory_space<vmem>>, vector<32x200xf32>
    %cst_17 = arith.constant dense<0xFF800000> : vector<32xf32>
    %49 = vector.multi_reduction <maximumf>, %48, %cst_17 [1] : vector<32x200xf32> to vector<32xf32>
    %50 = vector.shape_cast %49 : vector<32xf32> to vector<32x1xf32>
    %51 = vector.broadcast %50 : vector<32x1xf32> to vector<32x200xf32>
    %52 = arith.subf %48, %51 : vector<32x200xf32>
    %53 = math.exp %52 : vector<32x200xf32>
    %cst_18 = arith.constant dense<0.000000e+00> : vector<32xf32>
    %54 = vector.multi_reduction <add>, %53, %cst_18 [1] : vector<32x200xf32> to vector<32xf32>
    %55 = vector.shape_cast %54 : vector<32xf32> to vector<32x1xf32>
    %56 = math.log %55 : vector<32x1xf32>
    %57 = arith.addf %50, %56 : vector<32x1xf32>
    %58 = arith.mulf %48, %6 : vector<32x200xf32>
    %cst_19 = arith.constant dense<0.000000e+00> : vector<32xf32>
    %59 = vector.multi_reduction <add>, %58, %cst_19 [1] : vector<32x200xf32> to vector<32xf32>
    %60 = vector.shape_cast %59 : vector<32xf32> to vector<32x1xf32>
    %61 = arith.subf %57, %60 : vector<32x1xf32>
    %cst_20 = arith.constant 2.000000e-01 : f32
    %62 = vector.broadcast %cst_20 : f32 to vector<32x1xf32>
    %63 = arith.mulf %62, %61 : vector<32x1xf32>
    %64 = arith.addf %47, %63 : vector<32x1xf32>
    %cst_21 = arith.constant 0.000000e+00 : f32
    %65 = vector.broadcast %cst_21 : f32 to vector<32x1xf32>
    %66 = arith.select %12, %64, %65 : vector<32x1xi1>, vector<32x1xf32>
    %cst_22 = arith.constant dense<0.000000e+00> : vector<1xf32>
    %67 = vector.multi_reduction <add>, %66, %cst_22 [0] : vector<32x1xf32> to vector<1xf32>
    %68 = vector.shape_cast %67 : vector<1xf32> to vector<1x1xf32>
    %69 = vector.shape_cast %68 : vector<1x1xf32> to vector<1x1xf32>
    %70 = vector.broadcast %69 : vector<1x1xf32> to vector<8x128xf32>
    %c0_23 = arith.constant 0 : index
    %c0_24 = arith.constant 0 : index
    %71 = vector.load %arg5[%c0_23, %c0_24] : memref<8x128xf32, #tpu.memory_space<vmem>>, vector<8x128xf32>
    tpu.vector_store %arg5[%c0_23, %c0_24], %70 {strides = array<i32>} : memref<8x128xf32, #tpu.memory_space<vmem>>, vector<8x128xf32>,
    return
  }
  func.func @transform_0(%arg0: i32) -> (i32, i32) {
    %c0_i32 = arith.constant 0 : i32
    %c0_i32_0 = arith.constant 0 : i32
    return %arg0, %c0_i32 : i32, i32
  }
  func.func @transform_1(%arg0: i32) -> (i32, i32) {
    %c0_i32 = arith.constant 0 : i32
    %c0_i32_0 = arith.constant 0 : i32
    return %arg0, %c0_i32 : i32, i32
  }
  func.func @transform_2(%arg0: i32) -> (i32, i32) {
    %c0_i32 = arith.constant 0 : i32
    %c0_i32_0 = arith.constant 0 : i32
    return %arg0, %c0_i32 : i32, i32
  }
  func.func @transform_3(%arg0: i32) -> (i32, i32) {
    %c0_i32 = arith.constant 0 : i32
    %c0_i32_0 = arith.constant 0 : i32
    return %arg0, %c0_i32 : i32, i32
  }
  func.func @transform_4(%arg0: i32) -> (i32, i32) {
    %c0_i32 = arith.constant 0 : i32
    %c0_i32_0 = arith.constant 0 : i32
    return %arg0, %c0_i32 : i32, i32
  }
}

</mosaic_0001>

<llo_original>
// kernel: tpu_custom_call.1
$region0: #{tpu_custom_call.1}
  #allocation0 [shape = 'u32[]', space=smem, size = 0x4, offset = 0x4, fixed_abs, tag = 'smem constant byte address 0x4 - core index']
  #allocation1 [shape = 'u32[144,128]{1,0:T(1,128)}', space=vmem, size = 0x12000, scoped, tag = 'internal scratch']
  %s0 = inlined_call_operand.vmem [shape: s32[64,1], index: 0, kind: input, shape index: {}]
  %s1 = inlined_call_operand.hbm [shape: f32[64,200], index: 1, kind: input, shape index: {}]
  %s2 = inlined_call_operand.hbm [shape: f32[64,200], index: 2, kind: input, shape index: {}]
  %s3 = inlined_call_operand.hbm [shape: f32[64,200], index: 3, kind: input, shape index: {}]
  %s4 = inlined_call_operand.hbm [shape: f32[16,128], index: 4, kind: output, shape index: {}]
  %s5 = sld [smem:[#allocation0]]
  $region61: #{tpu_custom_call.1} parent=0
    _
  %s7 = ssub.s32 1, %s5
  %s8 = scalar_select 0, %s7, %s5
  $region1: #{tpu_custom_call.1} parent=0
    #allocation2 [shape = 'u8[65536]{0}', space=vmem, size = 0x10000, scoped, tag = 'input window, operand 1']
    #allocation3 [shape = 's32[2]{0}', space=sflag, size = 0x8, scoped, tag = 'scoped memory for tpu_custom_call.1']
    #allocation4 [shape = 's32[2]{0}', space=sflag, size = 0x8, scoped, tag = 'scoped memory for tpu_custom_call.1']
    #allocation5 [shape = 'u8[65536]{0}', space=vmem, size = 0x10000, scoped, tag = 'input window, operand 2']
    #allocation6 [shape = 's32[2]{0}', space=sflag, size = 0x8, scoped, tag = 'scoped memory for tpu_custom_call.1']
    #allocation7 [shape = 'u8[65536]{0}', space=vmem, size = 0x10000, scoped, tag = 'input window, operand 3']
    #allocation8 [shape = 'u8[8192]{0}', space=vmem, size = 0x2000, scoped, tag = 'output window, operand 0']
    %9 = vsyncpa [#allocation3], 0
    %s10 = scalar_lea.sflag [#allocation3], 1
    %11 = vsyncpa %s10, 0
    %12 = vsyncpa [#allocation6], 0
    %s13 = scalar_lea.sflag [#allocation6], 1
    %14 = vsyncpa %s13, 0
    %15 = vsyncpa [#allocation4], 0
    %s16 = scalar_lea.sflag [#allocation4], 1
    %17 = vsyncpa %s16, 0
    loop: start=0, step=1, limit=4
    $region2: #{tpu_custom_call.1} parent=1 // loop_pre_header
      _
    $region3: #{tpu_custom_call.1} parent=1 // loop_header
      %s19 = sphi 0, %s23
      %p20 = scmp.ge.s32.totalorder %s19, 4
      %s29 = sphi 0, %s31
      %s32 = sphi 0, %s29
      %s33 = sphi 0, %s32
      %s49 = sphi 0, %s33
      %s55 = sphi 0, %s57
      %s58 = sphi 0, %s55
      %s59 = sphi 0, %s58
      %s75 = sphi 0, %s59
      %s81 = sphi 0, %s83
      %s84 = sphi 0, %s81
      %s85 = sphi 0, %s84
      %s101 = sphi 0, %s85
      %s107 = sphi 0, %s109
      %s110 = sphi 0, %s107
      %s111 = sphi 0, %s110
      %s127 = sphi 0, %s111
      %s133 = sphi 0, %s135
      %s136 = sphi 0, %s133
      %s137 = sphi 0, %s136
      %s153 = sphi 0, %s137
    $region4: #{tpu_custom_call.1} parent=1 // loop_header_branch
      %22 = sbr.rel (%p20) target = $region8
    $region5: #{tpu_custom_call.1} parent=1 // loop_body
      %s24 = ssub.s32 %s19, 1
      %s25 = ssub.s32 %s19, 2
      %s26 = sadd.s32 %s19, 1
      %s27 = ssub.s32 %s19, %s26
      %p28 = scmp.eq.s32.totalorder %s27, 0
      %s30 = sadd.s32 %s29, 1
      %s31 = scalar_select %p28, %s29, %s30
      %p34 = pneg %p28
      %p35 = scmp.eq.s32.totalorder %s19, 1
      %p36 = por %p34, %p35
      %p37 = scmp.ne.s32.totalorder %s29, %s32
      %p38 = scmp.eq.s32.totalorder %s19, 0
      %p39 = por %p37, %p38
      %p40 = scmp.ne.s32.totalorder %s29, %s32
      %p41 = scmp.eq.s32.totalorder %s24, 1
      %p42 = por %p40, %p41
      %p43 = scmp.ne.s32.totalorder %s32, %s33
      %p44 = scmp.eq.s32.totalorder %s24, 0
      %p45 = por %p43, %p44
      %p46 = scmp.ne.s32.totalorder %s32, %s33
      %p47 = scmp.eq.s32.totalorder %s25, 1
      %p48 = por %p46, %p47
      %p50 = scmp.ne.s32.totalorder %s33, %s49
      %p51 = scmp.eq.s32.totalorder %s25, 0
      %p52 = por %p50, %p51
      %s53 = ssub.s32 %s19, %s26
      %p54 = scmp.eq.s32.totalorder %s53, 0
      %s56 = sadd.s32 %s55, 1
      %s57 = scalar_select %p54, %s55, %s56
      %p60 = pneg %p54
      %p61 = scmp.eq.s32.totalorder %s19, 1
      %p62 = por %p60, %p61
      %p63 = scmp.ne.s32.totalorder %s55, %s58
      %p64 = scmp.eq.s32.totalorder %s19, 0
      %p65 = por %p63, %p64
      %p66 = scmp.ne.s32.totalorder %s55, %s58
      %p67 = scmp.eq.s32.totalorder %s24, 1
      %p68 = por %p66, %p67
      %p69 = scmp.ne.s32.totalorder %s58, %s59
      %p70 = scmp.eq.s32.totalorder %s24, 0
      %p71 = por %p69, %p70
      %p72 = scmp.ne.s32.totalorder %s58, %s59
      %p73 = scmp.eq.s32.totalorder %s25, 1
      %p74 = por %p72, %p73
      %p76 = scmp.ne.s32.totalorder %s59, %s75
      %p77 = scmp.eq.s32.totalorder %s25, 0
      %p78 = por %p76, %p77
      %s79 = ssub.s32 %s19, %s26
      %p80 = scmp.eq.s32.totalorder %s79, 0
      %s82 = sadd.s32 %s81, 1
      %s83 = scalar_select %p80, %s81, %s82
      %p86 = pneg %p80
      %p87 = scmp.eq.s32.totalorder %s19, 1
      %p88 = por %p86, %p87
      %p89 = scmp.ne.s32.totalorder %s81, %s84
      %p90 = scmp.eq.s32.totalorder %s19, 0
      %p91 = por %p89, %p90
      %p92 = scmp.ne.s32.totalorder %s81, %s84
      %p93 = scmp.eq.s32.totalorder %s24, 1
      %p94 = por %p92, %p93
      %p95 = scmp.ne.s32.totalorder %s84, %s85
      %p96 = scmp.eq.s32.totalorder %s24, 0
      %p97 = por %p95, %p96
      %p98 = scmp.ne.s32.totalorder %s84, %s85
      %p99 = scmp.eq.s32.totalorder %s25, 1
      %p100 = por %p98, %p99
      %p102 = scmp.ne.s32.totalorder %s85, %s101
      %p103 = scmp.eq.s32.totalorder %s25, 0
      %p104 = por %p102, %p103
      %s105 = ssub.s32 %s19, %s26
      %p106 = scmp.eq.s32.totalorder %s105, 0
      %s108 = sadd.s32 %s107, 1
      %s109 = scalar_select %p106, %s107, %s108
      %p112 = pneg %p106
      %p113 = scmp.eq.s32.totalorder %s19, 1
      %p114 = por %p112, %p113
      %p115 = scmp.ne.s32.totalorder %s107, %s110
      %p116 = scmp.eq.s32.totalorder %s19, 0
      %p117 = por %p115, %p116
      %p118 = scmp.ne.s32.totalorder %s107, %s110
      %p119 = scmp.eq.s32.totalorder %s24, 1
      %p120 = por %p118, %p119
      %p121 = scmp.ne.s32.totalorder %s110, %s111
      %p122 = scmp.eq.s32.totalorder %s24, 0
      %p123 = por %p121, %p122
      %p124 = scmp.ne.s32.totalorder %s110, %s111
      %p125 = scmp.eq.s32.totalorder %s25, 1
      %p126 = por %p124, %p125
      %p128 = scmp.ne.s32.totalorder %s111, %s127
      %p129 = scmp.eq.s32.totalorder %s25, 0
      %p130 = por %p128, %p129
      %s131 = ssub.s32 %s19, %s26
      %p132 = scmp.eq.s32.totalorder %s131, 0
      %s134 = sadd.s32 %s133, 1
      %s135 = scalar_select %p132, %s133, %s134
      %p138 = pneg %p132
      %p139 = scmp.eq.s32.totalorder %s19, 1
      %p140 = por %p138, %p139
      %p141 = scmp.ne.s32.totalorder %s133, %s136
      %p142 = scmp.eq.s32.totalorder %s19, 0
      %p143 = por %p141, %p142
      %p144 = scmp.ne.s32.totalorder %s133, %s136
      %p145 = scmp.eq.s32.totalorder %s24, 1
      %p146 = por %p144, %p145
      %p147 = scmp.ne.s32.totalorder %s136, %s137
      %p148 = scmp.eq.s32.totalorder %s24, 0
      %p149 = por %p147, %p148
      %p150 = scmp.ne.s32.totalorder %s136, %s137
      %p151 = scmp.eq.s32.totalorder %s25, 1
      %p152 = por %p150, %p151
      %p154 = scmp.ne.s32.totalorder %s137, %s153
      %p155 = scmp.eq.s32.totalorder %s25, 0
      %p156 = por %p154, %p155
      %p157 = scmp.le.s32.totalorder 1, %s19
      %p158 = scmp.lt.s32.totalorder %s19, 3
      %p159 = pnand %p157, %p158
      %p160 = pneg %p159
      // Predicated region
      $region9: #{tpu_custom_call.1} parent=5 // pred_check
        _
      $region10: #{tpu_custom_call.1} parent=5 // pred_check_branch
        %162 = sbr.rel (%p159) target = $region12
      $region11: #{tpu_custom_call.1} parent=5 // pred_region
        %s163 = ssub.s32 %s19, 1
      $region12: #{tpu_custom_call.1} parent=5 // pred_fallthru
        _
      %p164 = scmp.lt.s32.totalorder %s19, 2
      // Predicated region
      $region13: #{tpu_custom_call.1} parent=5 // pred_check
        %p165 = pneg %p164
      $region14: #{tpu_custom_call.1} parent=5 // pred_check_branch
        %167 = sbr.rel (%p165) target = $region16
      $region15: #{tpu_custom_call.1} parent=5 // pred_region
        // Predicated region
        $region17: #{tpu_custom_call.1} parent=15 // pred_check
          %p168 = pneg %p39
        $region18: #{tpu_custom_call.1} parent=15 // pred_check_branch
          %170 = sbr.rel (%p168) target = $region20
        $region19: #{tpu_custom_call.1} parent=15 // pred_region
          %s171 = smul.u32 4, %s19
          %p172 = scmp.lt.s32.totalorder %s171, 7
          %s173 = scalar_select %p172, %s171, 7
          %s174 = smul.addr %s173, 8
          %s175 = scalar_lea.vmem %s0, %s174
          %s176 = smul.u32 4, %s19
        $region20: #{tpu_custom_call.1} parent=15 // pred_fallthru
          _
        // Predicated region
        $region21: #{tpu_custom_call.1} parent=15 // pred_check
          %p177 = pneg %p65
        $region22: #{tpu_custom_call.1} parent=15 // pred_check_branch
          %179 = sbr.rel (%p177) target = $region24
        $region23: #{tpu_custom_call.1} parent=15 // pred_region
          %s180 = sand.u32 %s55, 1
          %s181 = scalar_lea.sflag [#allocation3], %s180
          %s182 = sand.u32 %s55, 1
          %s183 = smul.addr %s182, 64
          %s184 = scalar_lea.vmem [#allocation2], %s183
          %s185 = smul.u32 4, %s19
          %s187 = ssub.s32 1024, 1024
          %188 = vsyncadd %s181, %s187
          %s189 = smul.addr %s185, 2
          %s190 = smul.addr %s189, 128
          %s191 = scalar_lea.hbm %s1, %s190
          %s192 = sshll.u32 %s184, 4
          %s193 = int_to_ptr.vmem [resolvable:$true] %s192
          %198 = dma.hbm_to_vmem [thread:$0]  %s191, 1024, %s193, %s181, 256, 256, 16
        $region24: #{tpu_custom_call.1} parent=15 // pred_fallthru
          _
        // Predicated region
        $region25: #{tpu_custom_call.1} parent=15 // pred_check
          %p199 = pneg %p91
        $region26: #{tpu_custom_call.1} parent=15 // pred_check_branch
          %201 = sbr.rel (%p199) target = $region28
        $region27: #{tpu_custom_call.1} parent=15 // pred_region
          %s202 = sand.u32 %s19, 1
          %s203 = scalar_lea.sflag [#allocation6], %s202
          %s204 = sand.u32 %s81, 1
          %s205 = smul.addr %s204, 64
          %s206 = scalar_lea.vmem [#allocation5], %s205
          %s207 = smul.u32 4, %s19
          %s209 = ssub.s32 1024, 1024
          %210 = vsyncadd %s203, %s209
          %s211 = smul.addr %s207, 2
          %s212 = smul.addr %s211, 128
          %s213 = scalar_lea.hbm %s2, %s212
          %s214 = sshll.u32 %s206, 4
          %s215 = int_to_ptr.vmem [resolvable:$true] %s214
          %220 = dma.hbm_to_vmem [thread:$0]  %s213, 1024, %s215, %s203, 256, 256, 16
        $region28: #{tpu_custom_call.1} parent=15 // pred_fallthru
          _
        // Predicated region
        $region29: #{tpu_custom_call.1} parent=15 // pred_check
          %p221 = pneg %p117
        $region30: #{tpu_custom_call.1} parent=15 // pred_check_branch
          %223 = sbr.rel (%p221) target = $region32
        $region31: #{tpu_custom_call.1} parent=15 // pred_region
          %s224 = sand.u32 %s19, 1
          %s225 = scalar_lea.sflag [#allocation6], %s224
          %s226 = sand.u32 %s107, 1
          %s227 = smul.addr %s226, 64
          %s228 = scalar_lea.vmem [#allocation7], %s227
          %s229 = smul.u32 4, %s19
          %s231 = ssub.s32 1024, 1024
          %232 = vsyncadd %s225, %s231
          %s233 = smul.addr %s229, 2
          %s234 = smul.addr %s233, 128
          %s235 = scalar_lea.hbm %s3, %s234
          %s236 = sshll.u32 %s228, 4
          %s237 = int_to_ptr.vmem [resolvable:$true] %s236
          %242 = dma.hbm_to_vmem [thread:$0]  %s235, 1024, %s237, %s225, 256, 256, 16
        $region32: #{tpu_custom_call.1} parent=15 // pred_fallthru
          _
      $region16: #{tpu_custom_call.1} parent=5 // pred_fallthru
        _
      %p243 = scmp.le.s32.totalorder 1, %s19
      %p244 = scmp.lt.s32.totalorder %s19, 3
      %p245 = pnand %p243, %p244
      %p246 = pneg %p245
      // Predicated region
      $region33: #{tpu_custom_call.1} parent=5 // pred_check
        _
      $region34: #{tpu_custom_call.1} parent=5 // pred_check_branch
        %248 = sbr.rel (%p245) target = $region36
      $region35: #{tpu_custom_call.1} parent=5 // pred_region
        %s249 = ssub.s32 %s19, 1
        %s250 = sand.u32 %s58, 1
        %s251 = scalar_lea.sflag [#allocation3], %s250
        %s252 = sand.u32 %s58, 1
        %s253 = smul.addr %s252, 64
        %s254 = scalar_lea.vmem [#allocation2], %s253
        // Predicated region
        $region37: #{tpu_custom_call.1} parent=35 // pred_check
          %p255 = pneg %p71
        $region38: #{tpu_custom_call.1} parent=35 // pred_check_branch
          %257 = sbr.rel (%p255) target = $region40
        $region39: #{tpu_custom_call.1} parent=35 // pred_region
          %258 = dma.done %s251, 1024
        $region40: #{tpu_custom_call.1} parent=35 // pred_fallthru
          _
        %s259 = sand.u32 %s24, 1
        %s260 = scalar_lea.sflag [#allocation6], %s259
        %s261 = sand.u32 %s84, 1
        %s262 = smul.addr %s261, 64
        %s263 = scalar_lea.vmem [#allocation5], %s262
        // Predicated region
        $region41: #{tpu_custom_call.1} parent=35 // pred_check
          %p264 = pneg %p97
        $region42: #{tpu_custom_call.1} parent=35 // pred_check_branch
          %266 = sbr.rel (%p264) target = $region44
        $region43: #{tpu_custom_call.1} parent=35 // pred_region
          %267 = dma.done %s260, 1024
        $region44: #{tpu_custom_call.1} parent=35 // pred_fallthru
          _
        %s268 = sand.u32 %s24, 1
        %s269 = scalar_lea.sflag [#allocation6], %s268
        %s270 = sand.u32 %s110, 1
        %s271 = smul.addr %s270, 64
        %s272 = scalar_lea.vmem [#allocation7], %s271
        // Predicated region
        $region45: #{tpu_custom_call.1} parent=35 // pred_check
          %p273 = pneg %p123
        $region46: #{tpu_custom_call.1} parent=35 // pred_check_branch
          %275 = sbr.rel (%p273) target = $region48
        $region47: #{tpu_custom_call.1} parent=35 // pred_region
          %276 = dma.done %s269, 1024
        $region48: #{tpu_custom_call.1} parent=35 // pred_fallthru
          _
        %s277 = smul.u32 4, %s24
        %p278 = scmp.lt.s32.totalorder %s277, 7
        %s279 = scalar_select %p278, %s277, 7
        %s280 = smul.addr %s279, 8
        %s281 = scalar_lea.vmem %s0, %s280
        %p282 = pneg %p45
        %p283 = pneg %p42
        %s284 = sand.u32 %s58, 1
        %s285 = scalar_lea.sflag [#allocation3], %s284
        %s286 = sand.u32 %s58, 1
        %s287 = smul.addr %s286, 64
        %s288 = scalar_lea.vmem [#allocation2], %s287
        %p289 = pneg %p71
        %p290 = pneg %p68
        %s291 = sand.u32 %s24, 1
        %s292 = scalar_lea.sflag [#allocation6], %s291
        %s293 = sand.u32 %s84, 1
        %s294 = smul.addr %s293, 64
        %s295 = scalar_lea.vmem [#allocation5], %s294
        %p296 = pneg %p97
        %p297 = pneg %p94
        %s298 = sand.u32 %s24, 1
        %s299 = scalar_lea.sflag [#allocation6], %s298
        %s300 = sand.u32 %s110, 1
        %s301 = smul.addr %s300, 64
        %s302 = scalar_lea.vmem [#allocation7], %s301
        %p303 = pneg %p123
        %p304 = pneg %p120
        %p305 = pneg %p149
        %p306 = pneg %p146
        %s307 = sand.u32 %s136, 1
        %s308 = scalar_lea.sflag [#allocation4], %s307
        %s309 = sand.u32 %s136, 1
        %s310 = smul.addr %s309, 8
        %s311 = scalar_lea.vmem [#allocation8], %s310
        %s312 = smul.u32 4, %s24
        %p313 = scmp.lt.s32.totalorder %s312, 7
        %s314 = scalar_select %p313, %s312, 7
        %s315 = smul.addr %s314, 8
        %s316 = scalar_lea.vmem %s0, %s315
        %s317 = smul.u32 4, %s24
        %s318 = smul.u32 4, %s24
        %s319 = smul.u32 4, %s24
        %s320 = smul.u32 4, %s24
        %v321 = vld [vmem:[%s316] sm:$0xff]
        %v322 = vld [vmem:[%s316 + $0x8] sm:$0xff]
        %v323 = vld [vmem:[%s316 + $0x10] sm:$0xff]
        %v324 = vld [vmem:[%s316 + $0x18] sm:$0xff]
        %v325 = vlaneseq
        %v326 = vand.u32 %v325, 127
        %v327 = vadd.s32 %v326, 128
        %328 = vset.pattern.permute.xlu0 0
        %329 = vperm.xlu0 %328, %v321
        %v330 = vpop.permute.xlu0 %329
        %331 = vset.pattern.permute.xlu0 0
        %332 = vperm.xlu0 %331, %v322
        %v333 = vpop.permute.xlu0 %332
        %334 = vset.pattern.permute.xlu0 0
        %335 = vperm.xlu0 %334, %v323
        %v336 = vpop.permute.xlu0 %335
        %337 = vset.pattern.permute.xlu0 0
        %338 = vperm.xlu0 %337, %v324
        %v339 = vpop.permute.xlu0 %338
        %vm340 = vcmp.eq.s32.totalorder %v326, %v330
        %vm341 = vcmp.eq.s32.totalorder %v327, %v330
        %vm342 = vcmp.eq.s32.totalorder %v326, %v333
        %vm343 = vcmp.eq.s32.totalorder %v327, %v333
        %vm344 = vcmp.eq.s32.totalorder %v326, %v336
        %vm345 = vcmp.eq.s32.totalorder %v327, %v336
        %vm346 = vcmp.eq.s32.totalorder %v326, %v339
        %vm347 = vcmp.eq.s32.totalorder %v327, %v339
        %v348 = vsel %vm340, 0.9005, 0.0005
        %v349 = vsel %vm341, 0.9005, 0.0005
        %v350 = vsel %vm342, 0.9005, 0.0005
        %v351 = vsel %vm343, 0.9005, 0.0005
        %v352 = vsel %vm344, 0.9005, 0.0005
        %v353 = vsel %vm345, 0.9005, 0.0005
        %v354 = vsel %vm346, 0.9005, 0.0005
        %v355 = vsel %vm347, 0.9005, 0.0005
        %v356 = vlaneseq
        %v357 = vshrl.u32 %v356, 7
        %v358 = vadd.s32 %v357, 8
        %v359 = vadd.s32 %v357, 16
        %v360 = vadd.s32 %v357, 24
        %s361 = smul.u32 %s24, 32
        %v362 = vstv %s361
        %v363 = vadd.s32 %v362, %v357
        %v364 = vadd.s32 %v362, %v358
        %v365 = vadd.s32 %v362, %v359
        %v366 = vadd.s32 %v362, %v360
        %vm367 = vcmp.lt.s32.totalorder %v363, 64
        %vm368 = vcmp.lt.s32.totalorder %v364, 64
        %vm369 = vcmp.lt.s32.totalorder %v365, 64
        %vm370 = vcmp.lt.s32.totalorder %v366, 64
        %v371 = vld [vmem:[%s254] sm:$0xff]
        %v372 = vld [vmem:[%s254 + $0x8] sm:$0xff]
        %v373 = vld [vmem:[%s254 + $0x10] sm:$0xff]
        %v374 = vld [vmem:[%s254 + $0x18] sm:$0xff]
        %v375 = vld [vmem:[%s254 + $0x20] sm:$0xff]
        %v376 = vld [vmem:[%s254 + $0x28] sm:$0xff]
        %v377 = vld [vmem:[%s254 + $0x30] sm:$0xff]
        %v378 = vld [vmem:[%s254 + $0x38] sm:$0xff]
        %vm379 = vcmask 588800
        %v380 = vsel %vm379, %v372, -inf
        %v381 = vmax.f32 %v371, %v380
        %382 = vmax.xlane.f32.xlu0 %v381
        %v383 = vpop.xlane.xlu0 %382
        %v384 = vsel %vm379, %v374, -inf
        %v385 = vmax.f32 %v373, %v384
        %386 = vmax.xlane.f32.xlu0 %v385
        %v387 = vpop.xlane.xlu0 %386
        %v388 = vsel %vm379, %v376, -inf
        %v389 = vmax.f32 %v375, %v388
        %390 = vmax.xlane.f32.xlu0 %v389
        %v391 = vpop.xlane.xlu0 %390
        %v392 = vsel %vm379, %v378, -inf
        %v393 = vmax.f32 %v377, %v392
        %394 = vmax.xlane.f32.xlu0 %v393
        %v395 = vpop.xlane.xlu0 %394
        %v396 = vsub.f32 %v371, %v383
        %v397 = vsub.f32 %v372, %v383
        %v398 = vsub.f32 %v373, %v387
        %v399 = vsub.f32 %v374, %v387
        %v400 = vsub.f32 %v375, %v391
        %v401 = vsub.f32 %v376, %v391
        %v402 = vsub.f32 %v377, %v395
        %v403 = vsub.f32 %v378, %v395
        %v404 = vmul.f32 %v396, 1.442695
        %v405 = vpow.pop %v404
        %v406 = vmul.f32 %v397, 1.442695
        %v407 = vpow.pop %v406
        %v408 = vmul.f32 %v398, 1.442695
        %v409 = vpow.pop %v408
        %v410 = vmul.f32 %v399, 1.442695
        %v411 = vpow.pop %v410
        %v412 = vmul.f32 %v400, 1.442695
        %v413 = vpow.pop %v412
        %v414 = vmul.f32 %v401, 1.442695
        %v415 = vpow.pop %v414
        %v416 = vmul.f32 %v402, 1.442695
        %v417 = vpow.pop %v416
        %v418 = vmul.f32 %v403, 1.442695
        %v419 = vpow.pop %v418
        %v420 = vsel %vm379, %v407, 0.0
        %v421 = vadd.f32 %v405, %v420
        %422 = vadd.xlane.f32.xlu0 %v421
        %v423 = vpop.xlane.xlu0 %422
        %v424 = vsel %vm379, %v411, 0.0
        %v425 = vadd.f32 %v409, %v424
        %426 = vadd.xlane.f32.xlu0 %v425
        %v427 = vpop.xlane.xlu0 %426
        %v428 = vsel %vm379, %v415, 0.0
        %v429 = vadd.f32 %v413, %v428
        %430 = vadd.xlane.f32.xlu0 %v429
        %v431 = vpop.xlane.xlu0 %430
        %v432 = vsel %vm379, %v419, 0.0
        %v433 = vadd.f32 %v417, %v432
        %434 = vadd.xlane.f32.xlu0 %v433
        %v435 = vpop.xlane.xlu0 %434
        %v436 = vlog2.pop %v423
        %v437 = vmul.f32 %v436, 0.6931472
        %v438 = vlog2.pop %v427
        %v439 = vmul.f32 %v438, 0.6931472
        %v440 = vlog2.pop %v431
        %v441 = vmul.f32 %v440, 0.6931472
        %v442 = vlog2.pop %v435
        %v443 = vmul.f32 %v442, 0.6931472
        %v444 = vadd.f32 %v383, %v437
        %v445 = vadd.f32 %v387, %v439
        %v446 = vadd.f32 %v391, %v441
        %v447 = vadd.f32 %v395, %v443
        %v448 = vmul.f32 %v371, %v348
        %v449 = vmul.f32 %v372, %v349
        %v450 = vmul.f32 %v373, %v350
        %v451 = vmul.f32 %v374, %v351
        %v452 = vmul.f32 %v375, %v352
        %v453 = vmul.f32 %v376, %v353
        %v454 = vmul.f32 %v377, %v354
        %v455 = vmul.f32 %v378, %v355
        %v456 = vsel %vm379, %v449, 0.0
        %v457 = vadd.f32 %v448, %v456
        %458 = vadd.xlane.f32.xlu0 %v457
        %v459 = vpop.xlane.xlu0 %458
        %v460 = vsel %vm379, %v451, 0.0
        %v461 = vadd.f32 %v450, %v460
        %462 = vadd.xlane.f32.xlu0 %v461
        %v463 = vpop.xlane.xlu0 %462
        %v464 = vsel %vm379, %v453, 0.0
        %v465 = vadd.f32 %v452, %v464
        %466 = vadd.xlane.f32.xlu0 %v465
        %v467 = vpop.xlane.xlu0 %466
        %v468 = vsel %vm379, %v455, 0.0
        %v469 = vadd.f32 %v454, %v468
        %470 = vadd.xlane.f32.xlu0 %v469
        %v471 = vpop.xlane.xlu0 %470
        %v472 = vsub.f32 %v444, %v459
        %v473 = vsub.f32 %v445, %v463
        %v474 = vsub.f32 %v446, %v467
        %v475 = vsub.f32 %v447, %v471
        %v476 = vmul.f32 %v472, 0.6
        %v477 = vmul.f32 %v473, 0.6
        %v478 = vmul.f32 %v474, 0.6
        %v479 = vmul.f32 %v475, 0.6
        %v480 = vadd.f32 %v476, 0.0
        %v481 = vadd.f32 %v477, 0.0
        %v482 = vadd.f32 %v478, 0.0
        %v483 = vadd.f32 %v479, 0.0
        %v484 = vld [vmem:[%s263] sm:$0xff]
        %v485 = vld [vmem:[%s263 + $0x8] sm:$0xff]
        %v486 = vld [vmem:[%s263 + $0x10] sm:$0xff]
        %v487 = vld [vmem:[%s263 + $0x18] sm:$0xff]
        %v488 = vld [vmem:[%s263 + $0x20] sm:$0xff]
        %v489 = vld [vmem:[%s263 + $0x28] sm:$0xff]
        %v490 = vld [vmem:[%s263 + $0x30] sm:$0xff]
        %v491 = vld [vmem:[%s263 + $0x38] sm:$0xff]
        %v492 = vsel %vm379, %v485, -inf
        %v493 = vmax.f32 %v484, %v492
        %494 = vmax.xlane.f32.xlu0 %v493
        %v495 = vpop.xlane.xlu0 %494
        %v496 = vsel %vm379, %v487, -inf
        %v497 = vmax.f32 %v486, %v496
        %498 = vmax.xlane.f32.xlu0 %v497
        %v499 = vpop.xlane.xlu0 %498
        %v500 = vsel %vm379, %v489, -inf
        %v501 = vmax.f32 %v488, %v500
        %502 = vmax.xlane.f32.xlu0 %v501
        %v503 = vpop.xlane.xlu0 %502
        %v504 = vsel %vm379, %v491, -inf
        %v505 = vmax.f32 %v490, %v504
        %506 = vmax.xlane.f32.xlu0 %v505
        %v507 = vpop.xlane.xlu0 %506
        %v508 = vsub.f32 %v484, %v495
        %v509 = vsub.f32 %v485, %v495
        %v510 = vsub.f32 %v486, %v499
        %v511 = vsub.f32 %v487, %v499
        %v512 = vsub.f32 %v488, %v503
        %v513 = vsub.f32 %v489, %v503
        %v514 = vsub.f32 %v490, %v507
        %v515 = vsub.f32 %v491, %v507
        %v516 = vmul.f32 %v508, 1.442695
        %v517 = vpow.pop %v516
        %v518 = vmul.f32 %v509, 1.442695
        %v519 = vpow.pop %v518
        %v520 = vmul.f32 %v510, 1.442695
        %v521 = vpow.pop %v520
        %v522 = vmul.f32 %v511, 1.442695
        %v523 = vpow.pop %v522
        %v524 = vmul.f32 %v512, 1.442695
        %v525 = vpow.pop %v524
        %v526 = vmul.f32 %v513, 1.442695
        %v527 = vpow.pop %v526
        %v528 = vmul.f32 %v514, 1.442695
        %v529 = vpow.pop %v528
        %v530 = vmul.f32 %v515, 1.442695
        %v531 = vpow.pop %v530
        %v532 = vsel %vm379, %v519, 0.0
        %v533 = vadd.f32 %v517, %v532
        %534 = vadd.xlane.f32.xlu0 %v533
        %v535 = vpop.xlane.xlu0 %534
        %v536 = vsel %vm379, %v523, 0.0
        %v537 = vadd.f32 %v521, %v536
        %538 = vadd.xlane.f32.xlu0 %v537
        %v539 = vpop.xlane.xlu0 %538
        %v540 = vsel %vm379, %v527, 0.0
        %v541 = vadd.f32 %v525, %v540
        %542 = vadd.xlane.f32.xlu0 %v541
        %v543 = vpop.xlane.xlu0 %542
        %v544 = vsel %vm379, %v531, 0.0
        %v545 = vadd.f32 %v529, %v544
        %546 = vadd.xlane.f32.xlu0 %v545
        %v547 = vpop.xlane.xlu0 %546
        %v548 = vlog2.pop %v535
        %v549 = vmul.f32 %v548, 0.6931472
        %v550 = vlog2.pop %v539
        %v551 = vmul.f32 %v550, 0.6931472
        %v552 = vlog2.pop %v543
        %v553 = vmul.f32 %v552, 0.6931472
        %v554 = vlog2.pop %v547
        %v555 = vmul.f32 %v554, 0.6931472
        %v556 = vadd.f32 %v495, %v549
        %v557 = vadd.f32 %v499, %v551
        %v558 = vadd.f32 %v503, %v553
        %v559 = vadd.f32 %v507, %v555
        %v560 = vmul.f32 %v484, %v348
        %v561 = vmul.f32 %v485, %v349
        %v562 = vmul.f32 %v486, %v350
        %v563 = vmul.f32 %v487, %v351
        %v564 = vmul.f32 %v488, %v352
        %v565 = vmul.f32 %v489, %v353
        %v566 = vmul.f32 %v490, %v354
        %v567 = vmul.f32 %v491, %v355
        %v568 = vsel %vm379, %v561, 0.0
        %v569 = vadd.f32 %v560, %v568
        %570 = vadd.xlane.f32.xlu0 %v569
        %v571 = vpop.xlane.xlu0 %570
        %v572 = vsel %vm379, %v563, 0.0
        %v573 = vadd.f32 %v562, %v572
        %574 = vadd.xlane.f32.xlu0 %v573
        %v575 = vpop.xlane.xlu0 %574
        %v576 = vsel %vm379, %v565, 0.0
        %v577 = vadd.f32 %v564, %v576
        %578 = vadd.xlane.f32.xlu0 %v577
        %v579 = vpop.xlane.xlu0 %578
        %v580 = vsel %vm379, %v567, 0.0
        %v581 = vadd.f32 %v566, %v580
        %582 = vadd.xlane.f32.xlu0 %v581
        %v583 = vpop.xlane.xlu0 %582
        %v584 = vsub.f32 %v556, %v571
        %v585 = vsub.f32 %v557, %v575
        %v586 = vsub.f32 %v558, %v579
        %v587 = vsub.f32 %v559, %v583
        %v588 = vmul.f32 %v584, 0.2
        %v589 = vmul.f32 %v585, 0.2
        %v590 = vmul.f32 %v586, 0.2
        %v591 = vmul.f32 %v587, 0.2
        %v592 = vadd.f32 %v480, %v588
        %v593 = vadd.f32 %v481, %v589
        %v594 = vadd.f32 %v482, %v590
        %v595 = vadd.f32 %v483, %v591
        %v596 = vld [vmem:[%s272] sm:$0xff]
        %v597 = vld [vmem:[%s272 + $0x8] sm:$0xff]
        %v598 = vld [vmem:[%s272 + $0x10] sm:$0xff]
        %v599 = vld [vmem:[%s272 + $0x18] sm:$0xff]
        %v600 = vld [vmem:[%s272 + $0x20] sm:$0xff]
        %v601 = vld [vmem:[%s272 + $0x28] sm:$0xff]
        %v602 = vld [vmem:[%s272 + $0x30] sm:$0xff]
        %v603 = vld [vmem:[%s272 + $0x38] sm:$0xff]
        %v604 = vsel %vm379, %v597, -inf
        %v605 = vmax.f32 %v596, %v604
        %606 = vmax.xlane.f32.xlu0 %v605
        %v607 = vpop.xlane.xlu0 %606
        %v608 = vsel %vm379, %v599, -inf
        %v609 = vmax.f32 %v598, %v608
        %610 = vmax.xlane.f32.xlu0 %v609
        %v611 = vpop.xlane.xlu0 %610
        %v612 = vsel %vm379, %v601, -inf
        %v613 = vmax.f32 %v600, %v612
        %614 = vmax.xlane.f32.xlu0 %v613
        %v615 = vpop.xlane.xlu0 %614
        %v616 = vsel %vm379, %v603, -inf
        %v617 = vmax.f32 %v602, %v616
        %618 = vmax.xlane.f32.xlu0 %v617
        %v619 = vpop.xlane.xlu0 %618
        %v620 = vsub.f32 %v596, %v607
        %v621 = vsub.f32 %v597, %v607
        %v622 = vsub.f32 %v598, %v611
        %v623 = vsub.f32 %v599, %v611
        %v624 = vsub.f32 %v600, %v615
        %v625 = vsub.f32 %v601, %v615
        %v626 = vsub.f32 %v602, %v619
        %v627 = vsub.f32 %v603, %v619
        %v628 = vmul.f32 %v620, 1.442695
        %v629 = vpow.pop %v628
        %v630 = vmul.f32 %v621, 1.442695
        %v631 = vpow.pop %v630
        %v632 = vmul.f32 %v622, 1.442695
        %v633 = vpow.pop %v632
        %v634 = vmul.f32 %v623, 1.442695
        %v635 = vpow.pop %v634
        %v636 = vmul.f32 %v624, 1.442695
        %v637 = vpow.pop %v636
        %v638 = vmul.f32 %v625, 1.442695
        %v639 = vpow.pop %v638
        %v640 = vmul.f32 %v626, 1.442695
        %v641 = vpow.pop %v640
        %v642 = vmul.f32 %v627, 1.442695
        %v643 = vpow.pop %v642
        %v644 = vsel %vm379, %v631, 0.0
        %v645 = vadd.f32 %v629, %v644
        %646 = vadd.xlane.f32.xlu0 %v645
        %v647 = vpop.xlane.xlu0 %646
        %v648 = vsel %vm379, %v635, 0.0
        %v649 = vadd.f32 %v633, %v648
        %650 = vadd.xlane.f32.xlu0 %v649
        %v651 = vpop.xlane.xlu0 %650
        %v652 = vsel %vm379, %v639, 0.0
        %v653 = vadd.f32 %v637, %v652
        %654 = vadd.xlane.f32.xlu0 %v653
        %v655 = vpop.xlane.xlu0 %654
        %v656 = vsel %vm379, %v643, 0.0
        %v657 = vadd.f32 %v641, %v656
        %658 = vadd.xlane.f32.xlu0 %v657
        %v659 = vpop.xlane.xlu0 %658
        %v660 = vlog2.pop %v647
        %v661 = vmul.f32 %v660, 0.6931472
        %v662 = vlog2.pop %v651
        %v663 = vmul.f32 %v662, 0.6931472
        %v664 = vlog2.pop %v655
        %v665 = vmul.f32 %v664, 0.6931472
        %v666 = vlog2.pop %v659
        %v667 = vmul.f32 %v666, 0.6931472
        %v668 = vadd.f32 %v607, %v661
        %v669 = vadd.f32 %v611, %v663
        %v670 = vadd.f32 %v615, %v665
        %v671 = vadd.f32 %v619, %v667
        %v672 = vmul.f32 %v596, %v348
        %v673 = vmul.f32 %v597, %v349
        %v674 = vmul.f32 %v598, %v350
        %v675 = vmul.f32 %v599, %v351
        %v676 = vmul.f32 %v600, %v352
        %v677 = vmul.f32 %v601, %v353
        %v678 = vmul.f32 %v602, %v354
        %v679 = vmul.f32 %v603, %v355
        %v680 = vsel %vm379, %v673, 0.0
        %v681 = vadd.f32 %v672, %v680
        %682 = vadd.xlane.f32.xlu0 %v681
        %v683 = vpop.xlane.xlu0 %682
        %v684 = vsel %vm379, %v675, 0.0
        %v685 = vadd.f32 %v674, %v684
        %686 = vadd.xlane.f32.xlu0 %v685
        %v687 = vpop.xlane.xlu0 %686
        %v688 = vsel %vm379, %v677, 0.0
        %v689 = vadd.f32 %v676, %v688
        %690 = vadd.xlane.f32.xlu0 %v689
        %v691 = vpop.xlane.xlu0 %690
        %v692 = vsel %vm379, %v679, 0.0
        %v693 = vadd.f32 %v678, %v692
        %694 = vadd.xlane.f32.xlu0 %v693
        %v695 = vpop.xlane.xlu0 %694
        %v696 = vsub.f32 %v668, %v683
        %v697 = vsub.f32 %v669, %v687
        %v698 = vsub.f32 %v670, %v691
        %v699 = vsub.f32 %v671, %v695
        %v700 = vmul.f32 %v696, 0.2
        %v701 = vmul.f32 %v697, 0.2
        %v702 = vmul.f32 %v698, 0.2
        %v703 = vmul.f32 %v699, 0.2
        %v704 = vadd.f32 %v592, %v700
        %v705 = vadd.f32 %v593, %v701
        %v706 = vadd.f32 %v594, %v702
        %v707 = vadd.f32 %v595, %v703
        %v708 = vsel %vm367, %v704, 0.0
        %v709 = vsel %vm368, %v705, 0.0
        %v710 = vsel %vm369, %v706, 0.0
        %v711 = vsel %vm370, %v707, 0.0
        %v712 = vadd.f32 %v708, %v709
        %v713 = vadd.f32 %v712, %v710
        %v714 = vadd.f32 %v713, %v711
        %v715 = vrot.slane %v714, 4
        %v716 = vadd.f32 %v714, %v715
        %v717 = vrot.slane %v716, 2
        %v718 = vadd.f32 %v716, %v717
        %v719 = vrot.slane %v718, 1
        %v720 = vadd.f32 %v718, %v719
        %721 = vst [vmem:[%s311] sm:$0xff] %v720
        %s722 = sand.u32 %s136, 1
        %s723 = scalar_lea.sflag [#allocation4], %s722
        %s724 = sand.u32 %s136, 1
        %s725 = smul.addr %s724, 8
        %s726 = scalar_lea.vmem [#allocation8], %s725
        // Predicated region
        $region49: #{tpu_custom_call.1} parent=35 // pred_check
          %p727 = pneg %p146
        $region50: #{tpu_custom_call.1} parent=35 // pred_check_branch
          %729 = sbr.rel (%p727) target = $region52
        $region51: #{tpu_custom_call.1} parent=35 // pred_region
          %s731 = ssub.s32 128, 128
          %732 = vsyncadd %s723, %s731
          %s733 = smul.addr %s24, 128
          %s734 = scalar_lea.hbm %s4, %s733
          %s736 = sshll.u32 %s726, 4
          %s737 = int_to_ptr.vmem [resolvable:$true] %s736
          %739 = dma.vmem_to_hbm [thread:$0]  %s737, 128, %s734, %s723
        $region52: #{tpu_custom_call.1} parent=35 // pred_fallthru
          _
      $region36: #{tpu_custom_call.1} parent=5 // pred_fallthru
        _
      %p740 = scmp.le.s32.totalorder 2, %s19
      // Predicated region
      $region53: #{tpu_custom_call.1} parent=5 // pred_check
        %p741 = pneg %p740
      $region54: #{tpu_custom_call.1} parent=5 // pred_check_branch
        %743 = sbr.rel (%p741) target = $region56
      $region55: #{tpu_custom_call.1} parent=5 // pred_region
        %s744 = ssub.s32 %s19, 2
        // Predicated region
        $region57: #{tpu_custom_call.1} parent=55 // pred_check
          %p745 = pneg %p152
        $region58: #{tpu_custom_call.1} parent=55 // pred_check_branch
          %747 = sbr.rel (%p745) target = $region60
        $region59: #{tpu_custom_call.1} parent=55 // pred_region
          %s748 = sand.u32 %s137, 1
          %s749 = scalar_lea.sflag [#allocation4], %s748
          %s750 = sand.u32 %s137, 1
          %s751 = smul.addr %s750, 8
          %s752 = scalar_lea.vmem [#allocation8], %s751
          %753 = dma.done %s749, 128
        $region60: #{tpu_custom_call.1} parent=55 // pred_fallthru
          _
      $region56: #{tpu_custom_call.1} parent=5 // pred_fallthru
        _
    $region6: #{tpu_custom_call.1} parent=1 // loop_footer
      %s23 = sadd.s32 1, %s19
    $region7: #{tpu_custom_call.1} parent=1 // loop_footer_branch
      %18 = sbr.rel target = $region3
    $region8: #{tpu_custom_call.1} parent=1 // loop_exit
      _
    %754 = vsyncpa [#allocation3], 1
    %s755 = scalar_lea.sflag [#allocation3], 1
    %756 = vsyncpa %s755, 1
    %757 = vsyncpa [#allocation6], 1
    %s758 = scalar_lea.sflag [#allocation6], 1
    %759 = vsyncpa %s758, 1
    %760 = vsyncpa [#allocation4], 1
    %s761 = scalar_lea.sflag [#allocation4], 1
    %762 = vsyncpa %s761, 1

</llo_original>
